<compile_context>
chip_gen: v6e
topology: v6e:2x2x1
jax: 0.10.0
libtpu: 0.0.40
codegen_flags: <defaults>
</compile_context>

<pallas_src>
import functools

import jax
import jax.numpy as jnp
from jax import lax
from jax.experimental import pallas as pl
from jax.experimental.pallas import tpu as pltpu


# ----------------------------------------------------------------------------
# Kernel: one MXU matmul + bias per (batch, row-strip) grid step.
# ----------------------------------------------------------------------------
def _upsampler_matmul_kernel(cols_ref, w_ref, b_ref, o_ref):
    # cols_ref: (1, TM, 9*Cin)   im2col rows for this strip
    # w_ref:    (9*Cin, K)       folded 3x3 weights (VMEM-resident, constant map)
    # b_ref:    (1, K)           folded bias
    # o_ref:    (1, TM, K)
    acc = jnp.dot(cols_ref[0], w_ref[...], preferred_element_type=jnp.float32)
    acc = acc + b_ref[...].astype(jnp.float32)
    o_ref[0] = acc.astype(o_ref.dtype)


# ----------------------------------------------------------------------------
# Parameter handling
# ----------------------------------------------------------------------------
def init_params(key, in_ch, out_ch, r, dtype=jnp.float32):
    """Synthetic weights in the torch Conv2d layout (Cout, Cin, kh, kw)."""
    K = out_ch * r * r
    ks = jax.random.split(key, 8)

    def w(k, shape, scale=0.05):
        return (scale * jax.random.normal(k, shape)).astype(dtype)

    return {
        "conv1_w": w(ks[0], (K, in_ch, 1, 1)),      "conv1_b": w(ks[1], (K,)),
        "conv3_w": w(ks[2], (K, in_ch, 3, 3)),      "conv3_b": w(ks[3], (K,)),
        "conv1x1_w": w(ks[4], (2 * in_ch, in_ch, 1, 1)),
        "conv1x1_b": w(ks[5], (2 * in_ch,)),
        "conv3x3_w": w(ks[6], (K, 2 * in_ch, 3, 3)), "conv3x3_b": w(ks[7], (K,)),
    }


def prepare_params(P, compute_dtype=jnp.float32):
    """Fold conv1 + conv3 + (conv1x1 -> bias-bordered pad -> conv3x3) into ONE 3x3
    conv: returns (w_fold: (9*Cin, K), b_fold: (1, K))."""
    K, Cin = P["conv1_w"].shape[:2]
    w1 = P["conv1_w"][:, :, 0, 0].astype(jnp.float32)        # (K, Cin)
    w3 = P["conv3_w"].astype(jnp.float32)                    # (K, Cin, 3, 3)
    w11 = P["conv1x1_w"][:, :, 0, 0].astype(jnp.float32)     # (Cmid, Cin)
    b11 = P["conv1x1_b"].astype(jnp.float32)                 # (Cmid,)
    w33 = P["conv3x3_w"].astype(jnp.float32)                 # (K, Cmid, 3, 3)

    # conv3x3(conv1x1(x_pad)) == 3x3 conv over x_pad with composed weights.
    comp = jnp.einsum("kmij,mc->kcij", w33, w11)              # (K, Cin, 3, 3)
    w_total = w3 + comp
    w_total = w_total.at[:, :, 1, 1].add(w1)                  # conv1 -> centre tap

    b_total = (P["conv1_b"].astype(jnp.float32)
               + P["conv3_b"].astype(jnp.float32)
               + P["conv3x3_b"].astype(jnp.float32)
               + jnp.einsum("kmij,m->k", w33, b11))           # (K,)

    # Row order (i*3+j)*Cin + c  — must match the wrapper's im2col column order.
    w_fold = jnp.transpose(w_total, (2, 3, 1, 0)).reshape(9 * Cin, K)
    return w_fold.astype(compute_dtype), b_total.reshape(1, K)


# ----------------------------------------------------------------------------
# Strip / VMEM sizing (v7x-safe by construction)
# ----------------------------------------------------------------------------
def _pick_rows_per_strip(H, W, K, elem_bytes=4, out_block_budget=8 << 20):
    """Largest H-strip whose output block stays under the VMEM budget."""
    max_rows = max(8, out_block_budget // (K * elem_bytes))
    if H * W <= max_rows:
        return H                                   # whole image per step
    for th in range(H, 0, -1):
        if H % th == 0 and th * W <= max_rows and (th * W) % 8 == 0:
            return th
    return H  # fallback: whole image (ragged strips not needed for this module)


# ----------------------------------------------------------------------------
# Forward pass
# ----------------------------------------------------------------------------
def upsampler_rep_forward(x_nchw, params, upscale_factor=4,
                          compute_dtype=jnp.float32):
    B, Cin, H, W = x_nchw.shape
    r = upscale_factor
    w_fold, b_fold = prepare_params(params, compute_dtype)
    KC, K = w_fold.shape                            # KC = 9*Cin, K = Cout*r*r
    Cout = K // (r * r)

    # im2col in the wrapper: column order (i*3+j)*Cin + c matches w_fold rows.
    # Input traffic is 9*Cin = 36 channels vs the K = 64 output channels.
    x = jnp.transpose(x_nchw, (0, 2, 3, 1))                     # NCHW -> NHWC
    xpad = jnp.pad(x, ((0, 0), (1, 1), (1, 1), (0, 0)))          # zero pad
    patches = jnp.stack(
        [xpad[:, i:i + H, j:j + W, :] for i in range(3) for j in range(3)],
        axis=3)                                                  # (B, H, W, 9, Cin)
    cols = patches.reshape(B, H * W, KC).astype(compute_dtype)

    TH = _pick_rows_per_strip(H, W, K)
    S = H // TH
    TM = TH * W                                                  # rows per grid step

    # VMEM budget derived from the actual block sizes (double-buffered in + out).
    in_bytes = TM * KC * jnp.dtype(compute_dtype).itemsize
    out_bytes = TM * K * jnp.dtype(x_nchw.dtype).itemsize
    w_bytes = KC * K * jnp.dtype(compute_dtype).itemsize + K * 4
    vmem_limit = int(min(max(2 * (in_bytes + out_bytes) + w_bytes + (4 << 20),
                             16 << 20), 64 << 20))

    out = pl.pallas_call(
        _upsampler_matmul_kernel,
        out_shape=jax.ShapeDtypeStruct((B, H * W, K), x_nchw.dtype),
        grid=(B, S),
        in_specs=[
            pl.BlockSpec((1, TM, KC), lambda b, s: (b, s, 0)),
            pl.BlockSpec((KC, K), lambda b, s: (0, 0)),     # weights: constant map
            pl.BlockSpec((1, K), lambda b, s: (0, 0)),      #   -> VMEM resident
        ],
        out_specs=pl.BlockSpec((1, TM, K), lambda b, s: (b, s, 0)),
        compiler_params=pltpu.CompilerParams(
            dimension_semantics=("parallel", "parallel"),
            vmem_limit_bytes=vmem_limit),
    )(cols, w_fold, b_fold)

    # PixelShuffle(r): pure layout permutation in the wrapper.
    # K index is the natural torch order k = c*r*r + i*r + j.
    y = out.reshape(B, H, W, Cout, r, r)
    y = jnp.transpose(y, (0, 3, 1, 4, 2, 5)).reshape(B, Cout, H * r, W * r)
    return y


# ----------------------------------------------------------------------------
# Pure-JAX reference of the PyTorch forward (for self-checking).
# ----------------------------------------------------------------------------
def _conv2d(x, w, b, padding):
    out = lax.conv_general_dilated(
        x, w, window_strides=(1, 1),
        padding=((padding, padding), (padding, padding)),
        dimension_numbers=("NCHW", "OIHW", "NCHW"))
    return out + b.reshape(1, -1, 1, 1)


def upsampler_rep_reference(x, P, upscale_factor=4):
    r = upscale_factor
    v1 = _conv2d(x, P["conv1x1_w"], P["conv1x1_b"], 0)
    v1 = jnp.pad(v1, ((0, 0), (0, 0), (1, 1), (1, 1)))
    b0 = P["conv1x1_b"].reshape(1, -1, 1, 1)
    v1 = v1.at[:, :, 0:1, :].set(b0)
    v1 = v1.at[:, :, -1:, :].set(b0)
    v1 = v1.at[:, :, :, 0:1].set(b0)
    v1 = v1.at[:, :, :, -1:].set(b0)
    v2 = _conv2d(v1, P["conv3x3_w"], P["conv3x3_b"], 0)
    out = (_conv2d(x, P["conv1_w"], P["conv1_b"], 0)
           + _conv2d(x, P["conv3_w"], P["conv3_b"], 1)
           + v2)
    B, KC, H, W = out.shape
    C = KC // (r * r)
    y = out.reshape(B, C, r, r, H, W)
    y = jnp.transpose(y, (0, 1, 4, 2, 5, 3)).reshape(B, C, H * r, W * r)
    return y


# ----------------------------------------------------------------------------
if __name__ == "__main__":
    key = jax.random.PRNGKey(0)
    kx, kp = jax.random.split(key)

    B, Cin, H, W = 2, 4, 16, 16                 # in_channels = out_channels = 4
    Cout, r = 4, 4                              # upscale_factor = 4 -> K = 64
    x = jax.random.normal(kx, (B, Cin, H, W), dtype=jnp.float32)
    params = init_params(kp, Cin, Cout, r)

    fwd = jax.jit(functools.partial(upsampler_rep_forward, upscale_factor=r))
    y = fwd(x, params)
    jax.block_until_ready(y)

    assert y.shape == (B, Cout, H * r, W * r) and y.dtype == jnp.float32

    y_ref = jax.jit(functools.partial(upsampler_rep_reference, upscale_factor=r))(x, params)
    jax.block_until_ready(y_ref)
    max_err = float(jnp.max(jnp.abs(y - y_ref)))
    assert max_err < 1e-3, f"mismatch vs reference: max abs err {max_err}"

    print("KERNEL_OK")
</pallas_src>

<mosaic_0001>
module attributes {stable_mosaic.version = 11 : i64} {
  func.func @_upsampler_matmul_kernel(%arg0: i32, %arg1: i32, %arg2: memref<1x256x36xf32, #tpu.memory_space<vmem>>, %arg3: memref<36x64xf32, #tpu.memory_space<vmem>>, %arg4: memref<1x64xf32, #tpu.memory_space<vmem>>, %arg5: memref<1x256x64xf32, #tpu.memory_space<vmem>>) attributes {dimension_semantics = [#tpu.dimension_semantics<parallel>, #tpu.dimension_semantics<parallel>], iteration_bounds = array<i64: 2, 1>, scalar_prefetch = 0 : i64, scratch_operands = 0 : i64, tpu.core_type = #tpu.core_type<tc>, window_params = [{transform_indices = @transform_0, window_bounds = array<i64: 1, 256, 36>}, {pipeline_mode = #tpu.pipeline_mode<synchronous>, transform_indices = @transform_1, window_bounds = array<i64: 36, 64>}, {pipeline_mode = #tpu.pipeline_mode<synchronous>, transform_indices = @transform_2, window_bounds = array<i64: 1, 64>}, {transform_indices = @transform_3, window_bounds = array<i64: 1, 256, 64>}]} {
    %c0 = arith.constant 0 : index
    %c0_0 = arith.constant 0 : index
    %c0_1 = arith.constant 0 : index
    %0 = vector.load %arg2[%c0, %c0_0, %c0_1] : memref<1x256x36xf32, #tpu.memory_space<vmem>>, vector<1x256x36xf32>
    %1 = vector.shape_cast %0 : vector<1x256x36xf32> to vector<256x36xf32>
    %c0_2 = arith.constant 0 : index
    %c0_3 = arith.constant 0 : index
    %2 = vector.load %arg3[%c0_2, %c0_3] : memref<36x64xf32, #tpu.memory_space<vmem>>, vector<36x64xf32>
    %cst = arith.constant dense<0.000000e+00> : vector<256x64xf32>
    %3 = tpu.matmul %1, %2, %cst {dimension_numbers = #tpu.dot_dimension_numbers<[1], [0], [0], [1], [0, 0, 1, 1], [], []>} : vector<256x36xf32>, vector<36x64xf32>, vector<256x64xf32> -> vector<256x64xf32>
    %c0_4 = arith.constant 0 : index
    %c0_5 = arith.constant 0 : index
    %4 = vector.load %arg4[%c0_4, %c0_5] : memref<1x64xf32, #tpu.memory_space<vmem>>, vector<1x64xf32>
    %5 = vector.broadcast %4 : vector<1x64xf32> to vector<256x64xf32>
    %6 = arith.addf %3, %5 : vector<256x64xf32>
    %c0_6 = arith.constant 0 : index
    %c0_7 = arith.constant 0 : index
    %c0_8 = arith.constant 0 : index
    %7 = vector.load %arg5[%c0_6, %c0_7, %c0_8] : memref<1x256x64xf32, #tpu.memory_space<vmem>>, vector<1x256x64xf32>
    %8 = vector.shape_cast %7 : vector<1x256x64xf32> to vector<256x64xf32>
    %9 = vector.shape_cast %6 : vector<256x64xf32> to vector<1x256x64xf32>
    tpu.vector_store %arg5[%c0_6, %c0_7, %c0_8], %9 {strides = array<i32>} : memref<1x256x64xf32, #tpu.memory_space<vmem>>, vector<1x256x64xf32>,
    return
  }
  func.func @transform_0(%arg0: i32, %arg1: i32) -> (i32, i32, i32) {
    %c0_i32 = arith.constant 0 : i32
    %c0_i32_0 = arith.constant 0 : i32
    return %arg0, %arg1, %c0_i32 : i32, i32, i32
  }
  func.func @transform_1(%arg0: i32, %arg1: i32) -> (i32, i32) {
    %c0_i32 = arith.constant 0 : i32
    %c0_i32_0 = arith.constant 0 : i32
    %c0_i32_1 = arith.constant 0 : i32
    return %c0_i32, %c0_i32_0 : i32, i32
  }
  func.func @transform_2(%arg0: i32, %arg1: i32) -> (i32, i32) {
    %c0_i32 = arith.constant 0 : i32
    %c0_i32_0 = arith.constant 0 : i32
    %c0_i32_1 = arith.constant 0 : i32
    return %c0_i32, %c0_i32_0 : i32, i32
  }
  func.func @transform_3(%arg0: i32, %arg1: i32) -> (i32, i32, i32) {
    %c0_i32 = arith.constant 0 : i32
    %c0_i32_0 = arith.constant 0 : i32
    return %arg0, %arg1, %c0_i32 : i32, i32, i32
  }
}

</mosaic_0001>

<llo_original>
// kernel: upsampler_rep_forward.1
$region0: #{upsampler_rep_forward.1}
  #allocation0 [shape = 'u32[]', space=smem, size = 0x4, offset = 0x4, fixed_abs, tag = 'smem constant byte address 0x4 - core index']
  #allocation1 [shape = 'u32[144,128]{1,0:T(1,128)}', space=vmem, size = 0x12000, scoped, tag = 'internal scratch']
  %s0 = inlined_call_operand.vmem [shape: f32[2,256,36], index: 0, kind: input, shape index: {}]
  %s1 = inlined_call_operand.vmem [shape: f32[36,64], index: 1, kind: input, shape index: {}]
  %s2 = inlined_call_operand.vmem [shape: f32[1,64], index: 2, kind: input, shape index: {}]
  %s3 = inlined_call_operand.vmem [shape: f32[2,256,64], index: 3, kind: output, shape index: {}]
  %s4 = sld [smem:[#allocation0]]
  $region45: #{upsampler_rep_forward.1} parent=0
    _
  %s6 = ssub.s32 1, %s4
  %s7 = scalar_select 0, %s6, %s4
  loop: start=0, step=1, limit=4
  $region2: #{upsampler_rep_forward.1} parent=0 // loop_pre_header
    _
  $region3: #{upsampler_rep_forward.1} parent=0 // loop_header
    %s9 = sphi 0, %s13
    %p10 = scmp.ge.s32.totalorder %s9, 4
    %s16 = sphi 0, %s28
    %s17 = sphi 0, %s24
    %s18 = sphi 0, %s16
    %s19 = sphi 0, %s17
    %s20 = sphi 0, %s18
    %s21 = sphi 0, %s19
    %s33 = sphi 0, %s35
    %s36 = sphi 0, %s33
    %s37 = sphi 0, %s36
    %s53 = sphi 0, %s37
    %s57 = sphi 0, %s57
    %s59 = sphi 0, %s57
    %s60 = sphi 0, %s59
    %s74 = sphi 0, %s60
    %s78 = sphi 0, %s78
    %s80 = sphi 0, %s78
    %s81 = sphi 0, %s80
    %s95 = sphi 0, %s81
    %s103 = sphi 0, %s105
    %s106 = sphi 0, %s103
    %s107 = sphi 0, %s106
    %s123 = sphi 0, %s107
  $region4: #{upsampler_rep_forward.1} parent=0 // loop_header_branch
    %12 = sbr.rel (%p10) target = $region8
  $region5: #{upsampler_rep_forward.1} parent=0 // loop_body
    %s14 = ssub.s32 %s9, 1
    %s15 = ssub.s32 %s9, 2
    %s22 = sadd.s32 1, %s17
    %p23 = scmp.ge.s32.totalorder %s22, 1
    %s24 = scalar_select %p23, 0, %s22
    %s25 = sadd.s32 1, %s16
    %s26 = scalar_select %p23, %s25, %s16
    %p27 = scmp.ge.s32.totalorder %s26, 2
    %s28 = scalar_select %p27, 0, %s26
    %s29 = ssub.s32 %s16, %s28
    %s30 = ssub.s32 %s17, %s24
    %s31 = sor.u32 %s29, %s30
    %p32 = scmp.eq.s32.totalorder %s31, 0
    %s34 = sadd.s32 %s33, 1
    %s35 = scalar_select %p32, %s33, %s34
    %p38 = pneg %p32
    %p39 = scmp.eq.s32.totalorder %s9, 1
    %p40 = por %p38, %p39
    %p41 = scmp.ne.s32.totalorder %s33, %s36
    %p42 = scmp.eq.s32.totalorder %s9, 0
    %p43 = por %p41, %p42
    %p44 = scmp.ne.s32.totalorder %s33, %s36
    %p45 = scmp.eq.s32.totalorder %s14, 1
    %p46 = por %p44, %p45
    %p47 = scmp.ne.s32.totalorder %s36, %s37
    %p48 = scmp.eq.s32.totalorder %s14, 0
    %p49 = por %p47, %p48
    %p50 = scmp.ne.s32.totalorder %s36, %s37
    %p51 = scmp.eq.s32.totalorder %s15, 1
    %p52 = por %p50, %p51
    %p54 = scmp.ne.s32.totalorder %s37, %s53
    %p55 = scmp.eq.s32.totalorder %s15, 0
    %p56 = por %p54, %p55
    %s58 = sadd.s32 %s57, 1
    %p61 = scmp.eq.s32.totalorder %s9, 1
    %p62 = scmp.ne.s32.totalorder %s57, %s59
    %p63 = scmp.eq.s32.totalorder %s9, 0
    %p64 = por %p62, %p63
    %p65 = scmp.ne.s32.totalorder %s57, %s59
    %p66 = scmp.eq.s32.totalorder %s14, 1
    %p67 = por %p65, %p66
    %p68 = scmp.ne.s32.totalorder %s59, %s60
    %p69 = scmp.eq.s32.totalorder %s14, 0
    %p70 = por %p68, %p69
    %p71 = scmp.ne.s32.totalorder %s59, %s60
    %p72 = scmp.eq.s32.totalorder %s15, 1
    %p73 = por %p71, %p72
    %p75 = scmp.ne.s32.totalorder %s60, %s74
    %p76 = scmp.eq.s32.totalorder %s15, 0
    %p77 = por %p75, %p76
    %s79 = sadd.s32 %s78, 1
    %p82 = scmp.eq.s32.totalorder %s9, 1
    %p83 = scmp.ne.s32.totalorder %s78, %s80
    %p84 = scmp.eq.s32.totalorder %s9, 0
    %p85 = por %p83, %p84
    %p86 = scmp.ne.s32.totalorder %s78, %s80
    %p87 = scmp.eq.s32.totalorder %s14, 1
    %p88 = por %p86, %p87
    %p89 = scmp.ne.s32.totalorder %s80, %s81
    %p90 = scmp.eq.s32.totalorder %s14, 0
    %p91 = por %p89, %p90
    %p92 = scmp.ne.s32.totalorder %s80, %s81
    %p93 = scmp.eq.s32.totalorder %s15, 1
    %p94 = por %p92, %p93
    %p96 = scmp.ne.s32.totalorder %s81, %s95
    %p97 = scmp.eq.s32.totalorder %s15, 0
    %p98 = por %p96, %p97
    %s99 = ssub.s32 %s16, %s28
    %s100 = ssub.s32 %s17, %s24
    %s101 = sor.u32 %s99, %s100
    %p102 = scmp.eq.s32.totalorder %s101, 0
    %s104 = sadd.s32 %s103, 1
    %s105 = scalar_select %p102, %s103, %s104
    %p108 = pneg %p102
    %p109 = scmp.eq.s32.totalorder %s9, 1
    %p110 = por %p108, %p109
    %p111 = scmp.ne.s32.totalorder %s103, %s106
    %p112 = scmp.eq.s32.totalorder %s9, 0
    %p113 = por %p111, %p112
    %p114 = scmp.ne.s32.totalorder %s103, %s106
    %p115 = scmp.eq.s32.totalorder %s14, 1
    %p116 = por %p114, %p115
    %p117 = scmp.ne.s32.totalorder %s106, %s107
    %p118 = scmp.eq.s32.totalorder %s14, 0
    %p119 = por %p117, %p118
    %p120 = scmp.ne.s32.totalorder %s106, %s107
    %p121 = scmp.eq.s32.totalorder %s15, 1
    %p122 = por %p120, %p121
    %p124 = scmp.ne.s32.totalorder %s107, %s123
    %p125 = scmp.eq.s32.totalorder %s15, 0
    %p126 = por %p124, %p125
    %p127 = scmp.le.s32.totalorder 1, %s9
    %p128 = scmp.lt.s32.totalorder %s9, 3
    %p129 = pnand %p127, %p128
    %p130 = pneg %p129
    // Predicated region
    $region9: #{upsampler_rep_forward.1} parent=5 // pred_check
      _
    $region10: #{upsampler_rep_forward.1} parent=5 // pred_check_branch
      %132 = sbr.rel (%p129) target = $region12
    $region11: #{upsampler_rep_forward.1} parent=5 // pred_region
      %s133 = ssub.s32 %s9, 1
      // Predicated region
      $region13: #{upsampler_rep_forward.1} parent=11 // pred_check
        %p134 = pneg %p70
      $region14: #{upsampler_rep_forward.1} parent=11 // pred_check_branch
        %136 = sbr.rel (%p134) target = $region16
      $region15: #{upsampler_rep_forward.1} parent=11 // pred_region
        _
      $region16: #{upsampler_rep_forward.1} parent=11 // pred_fallthru
        _
      // Predicated region
      $region17: #{upsampler_rep_forward.1} parent=11 // pred_check
        %p137 = pneg %p91
      $region18: #{upsampler_rep_forward.1} parent=11 // pred_check_branch
        %139 = sbr.rel (%p137) target = $region20
      $region19: #{upsampler_rep_forward.1} parent=11 // pred_region
        _
      $region20: #{upsampler_rep_forward.1} parent=11 // pred_fallthru
        _
    $region12: #{upsampler_rep_forward.1} parent=5 // pred_fallthru
      _
    %p140 = scmp.lt.s32.totalorder %s9, 2
    // Predicated region
    $region21: #{upsampler_rep_forward.1} parent=5 // pred_check
      %p141 = pneg %p140
    $region22: #{upsampler_rep_forward.1} parent=5 // pred_check_branch
      %143 = sbr.rel (%p141) target = $region24
    $region23: #{upsampler_rep_forward.1} parent=5 // pred_region
      // Predicated region
      $region25: #{upsampler_rep_forward.1} parent=23 // pred_check
        %p144 = pneg %p43
      $region26: #{upsampler_rep_forward.1} parent=23 // pred_check_branch
        %146 = sbr.rel (%p144) target = $region28
      $region27: #{upsampler_rep_forward.1} parent=23 // pred_region
        %s147 = smul.u32 32, %s17
        %p148 = scmp.lt.s32.totalorder %s16, 1
        %s149 = scalar_select %p148, %s16, 1
        %p150 = scmp.lt.s32.totalorder %s147, 31
        %s151 = scalar_select %p150, %s147, 31
        %s152 = smul.addr %s149, 32
        %s153 = sadd.s32 %s151, %s152
        %s154 = smul.addr %s153, 8
        %s155 = scalar_lea.vmem %s0, %s154
        %s156 = smul.u32 32, %s17
      $region28: #{upsampler_rep_forward.1} parent=23 // pred_fallthru
        _
    $region24: #{upsampler_rep_forward.1} parent=5 // pred_fallthru
      _
    %p157 = scmp.le.s32.totalorder 1, %s9
    %p158 = scmp.lt.s32.totalorder %s9, 3
    %p159 = pnand %p157, %p158
    %p160 = pneg %p159
    // Predicated region
    $region29: #{upsampler_rep_forward.1} parent=5 // pred_check
      _
    $region30: #{upsampler_rep_forward.1} parent=5 // pred_check_branch
      %162 = sbr.rel (%p159) target = $region32
    $region31: #{upsampler_rep_forward.1} parent=5 // pred_region
      %s163 = ssub.s32 %s9, 1
      %s164 = smul.u32 32, %s19
      %p165 = scmp.lt.s32.totalorder %s18, 1
      %s166 = scalar_select %p165, %s18, 1
      %p167 = scmp.lt.s32.totalorder %s164, 31
      %s168 = scalar_select %p167, %s164, 31
      %s169 = smul.addr %s166, 32
      %s170 = sadd.s32 %s168, %s169
      %s171 = smul.addr %s170, 8
      %s172 = scalar_lea.vmem %s0, %s171
      %p173 = pneg %p49
      %p174 = pneg %p46
      %p175 = pneg %p70
      %p176 = pneg %p67
      %p177 = pneg %p91
      %p178 = pneg %p88
      %p179 = pneg %p119
      %p180 = pneg %p116
      %s181 = smul.u32 32, %s19
      %p182 = scmp.lt.s32.totalorder %s18, 1
      %s183 = scalar_select %p182, %s18, 1
      %p184 = scmp.lt.s32.totalorder %s181, 31
      %s185 = scalar_select %p184, %s181, 31
      %s186 = smul.addr %s183, 32
      %s187 = sadd.s32 %s185, %s186
      %s188 = smul.addr %s187, 8
      %s189 = scalar_lea.vmem %s3, %s188
      %s190 = smul.u32 32, %s19
      %p191 = scmp.lt.s32.totalorder %s18, 1
      %s192 = scalar_select %p191, %s18, 1
      %p193 = scmp.lt.s32.totalorder %s190, 31
      %s194 = scalar_select %p193, %s190, 31
      %s195 = smul.addr %s192, 32
      %s196 = sadd.s32 %s194, %s195
      %s197 = smul.addr %s196, 8
      %s198 = scalar_lea.vmem %s0, %s197
      %s199 = smul.u32 32, %s19
      %s200 = smul.u32 32, %s19
      %p201 = scmp.lt.s32.totalorder %s18, 1
      %s202 = scalar_select %p201, %s18, 1
      %p203 = scmp.lt.s32.totalorder %s200, 31
      %s204 = scalar_select %p203, %s200, 31
      %s205 = smul.addr %s202, 32
      %s206 = sadd.s32 %s204, %s205
      %s207 = smul.addr %s206, 8
      %s208 = scalar_lea.vmem %s3, %s207
      %s209 = smul.u32 32, %s19
      %v210 = vld [vmem:[%s198] sm:$0xff]
      %v211 = vld [vmem:[%s198 + $0x8] sm:$0xff]
      %v212 = vld [vmem:[%s198 + $0x10] sm:$0xff]
      %v213 = vld [vmem:[%s198 + $0x18] sm:$0xff]
      %v214 = vld [vmem:[%s198 + $0x20] sm:$0xff]
      %v215 = vld [vmem:[%s198 + $0x28] sm:$0xff]
      %v216 = vld [vmem:[%s198 + $0x30] sm:$0xff]
      %v217 = vld [vmem:[%s198 + $0x38] sm:$0xff]
      %v218 = vld [vmem:[%s198 + $0x40] sm:$0xff]
      %v219 = vld [vmem:[%s198 + $0x48] sm:$0xff]
      %v220 = vld [vmem:[%s198 + $0x50] sm:$0xff]
      %v221 = vld [vmem:[%s198 + $0x58] sm:$0xff]
      %v222 = vld [vmem:[%s198 + $0x60] sm:$0xff]
      %v223 = vld [vmem:[%s198 + $0x68] sm:$0xff]
      %v224 = vld [vmem:[%s198 + $0x70] sm:$0xff]
      %v225 = vld [vmem:[%s198 + $0x78] sm:$0xff]
      %v226 = vld [vmem:[%s198 + $0x80] sm:$0xff]
      %v227 = vld [vmem:[%s198 + $0x88] sm:$0xff]
      %v228 = vld [vmem:[%s198 + $0x90] sm:$0xff]
      %v229 = vld [vmem:[%s198 + $0x98] sm:$0xff]
      %v230 = vld [vmem:[%s198 + $0xa0] sm:$0xff]
      %v231 = vld [vmem:[%s198 + $0xa8] sm:$0xff]
      %v232 = vld [vmem:[%s198 + $0xb0] sm:$0xff]
      %v233 = vld [vmem:[%s198 + $0xb8] sm:$0xff]
      %v234 = vld [vmem:[%s198 + $0xc0] sm:$0xff]
      %v235 = vld [vmem:[%s198 + $0xc8] sm:$0xff]
      %v236 = vld [vmem:[%s198 + $0xd0] sm:$0xff]
      %v237 = vld [vmem:[%s198 + $0xd8] sm:$0xff]
      %v238 = vld [vmem:[%s198 + $0xe0] sm:$0xff]
      %v239 = vld [vmem:[%s198 + $0xe8] sm:$0xff]
      %v240 = vld [vmem:[%s198 + $0xf0] sm:$0xff]
      %v241 = vld [vmem:[%s198 + $0xf8] sm:$0xff]
      %v242 = vld [vmem:[%s1] sm:$0xff]
      %v243 = vld [vmem:[%s1 + $0x8] sm:$0xff]
      %v244 = vld [vmem:[%s1 + $0x10] sm:$0xff]
      %v245 = vld [vmem:[%s1 + $0x18] sm:$0xff]
      %v246 = vld [vmem:[%s1 + $0x20] sm:$0xf]
      %v247 = vld [vmem:[%s2] sm:$0x1]
      %v249 = vlaneseq
      %v250 = vshrl.u32 %v249, 7
      %v251 = vsub.s32 0, %v250
      %v252 = vrot.slane %v247, %v251
      %vm254 = vcmask 293888
      %v256 = vsel %vm254, %v210, 0
      %v259 = vsel %vm254, %v211, 0
      %v262 = vsel %vm254, %v212, 0
      %v265 = vsel %vm254, %v213, 0
      %v268 = vsel %vm254, %v214, 0
      %v271 = vsel %vm254, %v215, 0
      %v274 = vsel %vm254, %v216, 0
      %v277 = vsel %vm254, %v217, 0
      %v280 = vsel %vm254, %v218, 0
      %v283 = vsel %vm254, %v219, 0
      %v286 = vsel %vm254, %v220, 0
      %v289 = vsel %vm254, %v221, 0
      %v292 = vsel %vm254, %v222, 0
      %v295 = vsel %vm254, %v223, 0
      %v298 = vsel %vm254, %v224, 0
      %v301 = vsel %vm254, %v225, 0
      %v304 = vsel %vm254, %v226, 0
      %v307 = vsel %vm254, %v227, 0
      %v310 = vsel %vm254, %v228, 0
      %v313 = vsel %vm254, %v229, 0
      %v316 = vsel %vm254, %v230, 0
      %v319 = vsel %vm254, %v231, 0
      %v322 = vsel %vm254, %v232, 0
      %v325 = vsel %vm254, %v233, 0
      %v328 = vsel %vm254, %v234, 0
      %v331 = vsel %vm254, %v235, 0
      %v334 = vsel %vm254, %v236, 0
      %v337 = vsel %vm254, %v237, 0
      %v340 = vsel %vm254, %v238, 0
      %v343 = vsel %vm254, %v239, 0
      %v346 = vsel %vm254, %v240, 0
      %v349 = vsel %vm254, %v241, 0
      %vm351 = vcmask 1043456
      %v353 = vsel %vm351, %v246, 0
      %355 = vmatprep.subr.mxu0 0.0
      %356 = vmatpush1.msra.mxu0 0.0
      %357 = vmatprep.subr.mxu0 0.0
      %358 = vmatpush1.msra.mxu0 0.0
      %359 = vmatprep.subr.mxu0 0.0
      %360 = vmatpush1.msra.mxu0 0.0
      %361 = vmatprep.subr.mxu0 0.0
      %362 = vmatpush1.msra.mxu0 0.0
      %363 = vmatprep.subr.mxu0 0.0
      %364 = vmatpush1.msra.mxu0 0.0
      %365 = vmatprep.subr.mxu0 0.0
      %366 = vmatpush1.msra.mxu0 0.0
      %367 = vmatprep.subr.mxu0 0.0
      %368 = vmatpush1.msra.mxu0 0.0
      %369 = vmatprep.subr.mxu0 0.0
      %370 = vmatpush1.msra.mxu0 0.0
      %371 = vmatprep.subr.mxu0 0.0
      %372 = vmatpush1.msra.mxu0 0.0
      %373 = vmatprep.subr.mxu0 0.0
      %374 = vmatpush1.msra.mxu0 0.0
      %375 = vmatprep.subr.mxu0 0.0
      %376 = vmatpush1.msra.mxu0 0.0
      %377 = vmatprep.subr.mxu0 0.0
      %378 = vmatpush1.msra.mxu0 %v353
      %379 = vmatprep.subr.mxu0 0.0
      %380 = vmatpush1.msra.mxu0 %v245
      %381 = vmatprep.subr.mxu0 0.0
      %382 = vmatpush1.msra.mxu0 %v244
      %383 = vmatprep.subr.mxu0 0.0
      %384 = vmatpush1.msra.mxu0 %v243
      %385 = vmatprep.subr.mxu0 0.0
      %386 = vmatpush1.msra.mxu0 %v242
      %387 = vmatprep.subr.mxu0 0.0
      %388 = vmatpush2.msra.mxu0 0.0
      %389 = vmatprep.subr.mxu0 0.0
      %390 = vmatpush2.msra.mxu0 0.0
      %391 = vmatprep.subr.mxu0 0.0
      %392 = vmatpush2.msra.mxu0 0.0
      %393 = vmatprep.subr.mxu0 0.0
      %394 = vmatpush2.msra.mxu0 0.0
      %395 = vmatprep.subr.mxu0 0.0
      %396 = vmatpush2.msra.mxu0 0.0
      %397 = vmatprep.subr.mxu0 0.0
      %398 = vmatpush2.msra.mxu0 0.0
      %399 = vmatprep.subr.mxu0 0.0
      %400 = vmatpush2.msra.mxu0 0.0
      %401 = vmatprep.subr.mxu0 0.0
      %402 = vmatpush2.msra.mxu0 0.0
      %403 = vmatprep.subr.mxu0 0.0
      %404 = vmatpush2.msra.mxu0 0.0
      %405 = vmatprep.subr.mxu0 0.0
      %406 = vmatpush2.msra.mxu0 0.0
      %407 = vmatprep.subr.mxu0 0.0
      %408 = vmatpush2.msra.mxu0 0.0
      %409 = vmatprep.subr.mxu0 0.0
      %410 = vmatpush2.msra.mxu0 0.0
      %411 = vmatprep.subr.mxu0 0.0
      %412 = vmatpush2.msra.mxu0 0.0
      %413 = vmatprep.subr.mxu0 0.0
      %414 = vmatpush2.msra.mxu0 0.0
      %415 = vmatprep.subr.mxu0 0.0
      %416 = vmatpush2.msra.mxu0 0.0
      %417 = vmatprep.subr.mxu0 0.0
      %418 = vmatpush2.msra.mxu0 0.0
      %419 = vmatprep.mubr.f32.mxu0 0.0
      %420 = vmatmul.mubr.f32.gmra.mxu0 %v256
      %v421 = vpop.f32.mrf.mxu0
      %v422 = vadd.f32 %v252, %v421
      %v423 = vpop.f32.mrf.mxu0
      %424 = vmatprep.mubr.f32.mxu0 0.0
      %425 = vmatmul.mubr.f32.gmra.mxu0 %v259
      %v426 = vpop.f32.mrf.mxu0
      %v427 = vadd.f32 %v252, %v426
      %v428 = vpop.f32.mrf.mxu0
      %429 = vmatprep.mubr.f32.mxu0 0.0
      %430 = vmatmul.mubr.f32.gmra.mxu0 %v262
      %v431 = vpop.f32.mrf.mxu0
      %v432 = vadd.f32 %v252, %v431
      %v433 = vpop.f32.mrf.mxu0
      %434 = vmatprep.mubr.f32.mxu0 0.0
      %435 = vmatmul.mubr.f32.gmra.mxu0 %v265
      %v436 = vpop.f32.mrf.mxu0
      %v437 = vadd.f32 %v252, %v436
      %v438 = vpop.f32.mrf.mxu0
      %439 = vmatprep.mubr.f32.mxu0 0.0
      %440 = vmatmul.mubr.f32.gmra.mxu0 %v268
      %v441 = vpop.f32.mrf.mxu0
      %v442 = vadd.f32 %v252, %v441
      %v443 = vpop.f32.mrf.mxu0
      %444 = vmatprep.mubr.f32.mxu0 0.0
      %445 = vmatmul.mubr.f32.gmra.mxu0 %v271
      %v446 = vpop.f32.mrf.mxu0
      %v447 = vadd.f32 %v252, %v446
      %v448 = vpop.f32.mrf.mxu0
      %449 = vmatprep.mubr.f32.mxu0 0.0
      %450 = vmatmul.mubr.f32.gmra.mxu0 %v274
      %v451 = vpop.f32.mrf.mxu0
      %v452 = vadd.f32 %v252, %v451
      %v453 = vpop.f32.mrf.mxu0
      %454 = vmatprep.mubr.f32.mxu0 0.0
      %455 = vmatmul.mubr.f32.gmra.mxu0 %v277
      %v456 = vpop.f32.mrf.mxu0
      %v457 = vadd.f32 %v252, %v456
      %v458 = vpop.f32.mrf.mxu0
      %459 = vmatprep.mubr.f32.mxu0 0.0
      %460 = vmatmul.mubr.f32.gmra.mxu0 %v280
      %v461 = vpop.f32.mrf.mxu0
      %v462 = vadd.f32 %v252, %v461
      %v463 = vpop.f32.mrf.mxu0
      %464 = vmatprep.mubr.f32.mxu0 0.0
      %465 = vmatmul.mubr.f32.gmra.mxu0 %v283
      %v466 = vpop.f32.mrf.mxu0
      %v467 = vadd.f32 %v252, %v466
      %v468 = vpop.f32.mrf.mxu0
      %469 = vmatprep.mubr.f32.mxu0 0.0
      %470 = vmatmul.mubr.f32.gmra.mxu0 %v286
      %v471 = vpop.f32.mrf.mxu0
      %v472 = vadd.f32 %v252, %v471
      %v473 = vpop.f32.mrf.mxu0
      %474 = vmatprep.mubr.f32.mxu0 0.0
      %475 = vmatmul.mubr.f32.gmra.mxu0 %v289
      %v476 = vpop.f32.mrf.mxu0
      %v477 = vadd.f32 %v252, %v476
      %v478 = vpop.f32.mrf.mxu0
      %479 = vmatprep.mubr.f32.mxu0 0.0
      %480 = vmatmul.mubr.f32.gmra.mxu0 %v292
      %v481 = vpop.f32.mrf.mxu0
      %v482 = vadd.f32 %v252, %v481
      %v483 = vpop.f32.mrf.mxu0
      %484 = vmatprep.mubr.f32.mxu0 0.0
      %485 = vmatmul.mubr.f32.gmra.mxu0 %v295
      %v486 = vpop.f32.mrf.mxu0
      %v487 = vadd.f32 %v252, %v486
      %v488 = vpop.f32.mrf.mxu0
      %489 = vmatprep.mubr.f32.mxu0 0.0
      %490 = vmatmul.mubr.f32.gmra.mxu0 %v298
      %v491 = vpop.f32.mrf.mxu0
      %v492 = vadd.f32 %v252, %v491
      %v493 = vpop.f32.mrf.mxu0
      %494 = vmatprep.mubr.f32.mxu0 0.0
      %495 = vmatmul.mubr.f32.gmra.mxu0 %v301
      %v496 = vpop.f32.mrf.mxu0
      %v497 = vadd.f32 %v252, %v496
      %v498 = vpop.f32.mrf.mxu0
      %499 = vmatprep.mubr.f32.mxu0 0.0
      %500 = vmatmul.mubr.f32.gmra.mxu0 %v304
      %v501 = vpop.f32.mrf.mxu0
      %v502 = vadd.f32 %v252, %v501
      %v503 = vpop.f32.mrf.mxu0
      %504 = vmatprep.mubr.f32.mxu0 0.0
      %505 = vmatmul.mubr.f32.gmra.mxu0 %v307
      %v506 = vpop.f32.mrf.mxu0
      %v507 = vadd.f32 %v252, %v506
      %v508 = vpop.f32.mrf.mxu0
      %509 = vmatprep.mubr.f32.mxu0 0.0
      %510 = vmatmul.mubr.f32.gmra.mxu0 %v310
      %v511 = vpop.f32.mrf.mxu0
      %v512 = vadd.f32 %v252, %v511
      %v513 = vpop.f32.mrf.mxu0
      %514 = vmatprep.mubr.f32.mxu0 0.0
      %515 = vmatmul.mubr.f32.gmra.mxu0 %v313
      %v516 = vpop.f32.mrf.mxu0
      %v517 = vadd.f32 %v252, %v516
      %v518 = vpop.f32.mrf.mxu0
      %519 = vmatprep.mubr.f32.mxu0 0.0
      %520 = vmatmul.mubr.f32.gmra.mxu0 %v316
      %v521 = vpop.f32.mrf.mxu0
      %v522 = vadd.f32 %v252, %v521
      %v523 = vpop.f32.mrf.mxu0
      %524 = vmatprep.mubr.f32.mxu0 0.0
      %525 = vmatmul.mubr.f32.gmra.mxu0 %v319
      %v526 = vpop.f32.mrf.mxu0
      %v527 = vadd.f32 %v252, %v526
      %v528 = vpop.f32.mrf.mxu0
      %529 = vmatprep.mubr.f32.mxu0 0.0
      %530 = vmatmul.mubr.f32.gmra.mxu0 %v322
      %v531 = vpop.f32.mrf.mxu0
      %v532 = vadd.f32 %v252, %v531
      %v533 = vpop.f32.mrf.mxu0
      %534 = vmatprep.mubr.f32.mxu0 0.0
      %535 = vmatmul.mubr.f32.gmra.mxu0 %v325
      %v536 = vpop.f32.mrf.mxu0
      %v537 = vadd.f32 %v252, %v536
      %v538 = vpop.f32.mrf.mxu0
      %539 = vmatprep.mubr.f32.mxu0 0.0
      %540 = vmatmul.mubr.f32.gmra.mxu0 %v328
      %v541 = vpop.f32.mrf.mxu0
      %v542 = vadd.f32 %v252, %v541
      %v543 = vpop.f32.mrf.mxu0
      %544 = vmatprep.mubr.f32.mxu0 0.0
      %545 = vmatmul.mubr.f32.gmra.mxu0 %v331
      %v546 = vpop.f32.mrf.mxu0
      %v547 = vadd.f32 %v252, %v546
      %v548 = vpop.f32.mrf.mxu0
      %549 = vmatprep.mubr.f32.mxu0 0.0
      %550 = vmatmul.mubr.f32.gmra.mxu0 %v334
      %v551 = vpop.f32.mrf.mxu0
      %v552 = vadd.f32 %v252, %v551
      %v553 = vpop.f32.mrf.mxu0
      %554 = vmatprep.mubr.f32.mxu0 0.0
      %555 = vmatmul.mubr.f32.gmra.mxu0 %v337
      %v556 = vpop.f32.mrf.mxu0
      %v557 = vadd.f32 %v252, %v556
      %v558 = vpop.f32.mrf.mxu0
      %559 = vmatprep.mubr.f32.mxu0 0.0
      %560 = vmatmul.mubr.f32.gmra.mxu0 %v340
      %v561 = vpop.f32.mrf.mxu0
      %v562 = vadd.f32 %v252, %v561
      %v563 = vpop.f32.mrf.mxu0
      %564 = vmatprep.mubr.f32.mxu0 0.0
      %565 = vmatmul.mubr.f32.gmra.mxu0 %v343
      %v566 = vpop.f32.mrf.mxu0
      %v567 = vadd.f32 %v252, %v566
      %v568 = vpop.f32.mrf.mxu0
      %569 = vmatprep.mubr.f32.mxu0 0.0
      %570 = vmatmul.mubr.f32.gmra.mxu0 %v346
      %v571 = vpop.f32.mrf.mxu0
      %v572 = vadd.f32 %v252, %v571
      %v573 = vpop.f32.mrf.mxu0
      %574 = vmatprep.mubr.f32.mxu0 0.0
      %575 = vmatmul.mubr.f32.gmra.mxu0 %v349
      %v576 = vpop.f32.mrf.mxu0
      %v577 = vadd.f32 %v252, %v576
      %v578 = vpop.f32.mrf.mxu0
      %579 = vdwg.mxu0
      %vm580 = vcmask 523264
      %581 = vst.msk [vmem:[%s208] sm:$0xff] %vm580, %v422
      %582 = vst.msk [vmem:[%s208 + $0x8] sm:$0xff] %vm580, %v427
      %583 = vst.msk [vmem:[%s208 + $0x10] sm:$0xff] %vm580, %v432
      %584 = vst.msk [vmem:[%s208 + $0x18] sm:$0xff] %vm580, %v437
      %585 = vst.msk [vmem:[%s208 + $0x20] sm:$0xff] %vm580, %v442
      %586 = vst.msk [vmem:[%s208 + $0x28] sm:$0xff] %vm580, %v447
      %587 = vst.msk [vmem:[%s208 + $0x30] sm:$0xff] %vm580, %v452
      %588 = vst.msk [vmem:[%s208 + $0x38] sm:$0xff] %vm580, %v457
      %589 = vst.msk [vmem:[%s208 + $0x40] sm:$0xff] %vm580, %v462
      %590 = vst.msk [vmem:[%s208 + $0x48] sm:$0xff] %vm580, %v467
      %591 = vst.msk [vmem:[%s208 + $0x50] sm:$0xff] %vm580, %v472
      %592 = vst.msk [vmem:[%s208 + $0x58] sm:$0xff] %vm580, %v477
      %593 = vst.msk [vmem:[%s208 + $0x60] sm:$0xff] %vm580, %v482
      %594 = vst.msk [vmem:[%s208 + $0x68] sm:$0xff] %vm580, %v487
      %595 = vst.msk [vmem:[%s208 + $0x70] sm:$0xff] %vm580, %v492
      %596 = vst.msk [vmem:[%s208 + $0x78] sm:$0xff] %vm580, %v497
      %597 = vst.msk [vmem:[%s208 + $0x80] sm:$0xff] %vm580, %v502
      %598 = vst.msk [vmem:[%s208 + $0x88] sm:$0xff] %vm580, %v507
      %599 = vst.msk [vmem:[%s208 + $0x90] sm:$0xff] %vm580, %v512
      %600 = vst.msk [vmem:[%s208 + $0x98] sm:$0xff] %vm580, %v517
      %601 = vst.msk [vmem:[%s208 + $0xa0] sm:$0xff] %vm580, %v522
      %602 = vst.msk [vmem:[%s208 + $0xa8] sm:$0xff] %vm580, %v527
      %603 = vst.msk [vmem:[%s208 + $0xb0] sm:$0xff] %vm580, %v532
      %604 = vst.msk [vmem:[%s208 + $0xb8] sm:$0xff] %vm580, %v537
      %605 = vst.msk [vmem:[%s208 + $0xc0] sm:$0xff] %vm580, %v542
      %606 = vst.msk [vmem:[%s208 + $0xc8] sm:$0xff] %vm580, %v547
      %607 = vst.msk [vmem:[%s208 + $0xd0] sm:$0xff] %vm580, %v552
      %608 = vst.msk [vmem:[%s208 + $0xd8] sm:$0xff] %vm580, %v557
      %609 = vst.msk [vmem:[%s208 + $0xe0] sm:$0xff] %vm580, %v562
      %610 = vst.msk [vmem:[%s208 + $0xe8] sm:$0xff] %vm580, %v567
      %611 = vst.msk [vmem:[%s208 + $0xf0] sm:$0xff] %vm580, %v572
      %612 = vst.msk [vmem:[%s208 + $0xf8] sm:$0xff] %vm580, %v577
      %s613 = smul.u32 32, %s19
      %p614 = scmp.lt.s32.totalorder %s18, 1
      %s615 = scalar_select %p614, %s18, 1
      %p616 = scmp.lt.s32.totalorder %s613, 31
      %s617 = scalar_select %p616, %s613, 31
      %s618 = smul.addr %s615, 32
      %s619 = sadd.s32 %s617, %s618
      %s620 = smul.addr %s619, 8
      %s621 = scalar_lea.vmem %s3, %s620
      // Predicated region
      $region33: #{upsampler_rep_forward.1} parent=31 // pred_check
        %p622 = pneg %p116
      $region34: #{upsampler_rep_forward.1} parent=31 // pred_check_branch
        %624 = sbr.rel (%p622) target = $region36
      $region35: #{upsampler_rep_forward.1} parent=31 // pred_region
        %s625 = smul.u32 32, %s19
      $region36: #{upsampler_rep_forward.1} parent=31 // pred_fallthru
        _
    $region32: #{upsampler_rep_forward.1} parent=5 // pred_fallthru
      _
    %p626 = scmp.le.s32.totalorder 2, %s9
    // Predicated region
    $region37: #{upsampler_rep_forward.1} parent=5 // pred_check
      %p627 = pneg %p626
    $region38: #{upsampler_rep_forward.1} parent=5 // pred_check_branch
      %629 = sbr.rel (%p627) target = $region40
    $region39: #{upsampler_rep_forward.1} parent=5 // pred_region
      %s630 = ssub.s32 %s9, 2
      // Predicated region
      $region41: #{upsampler_rep_forward.1} parent=39 // pred_check
        %p631 = pneg %p122
      $region42: #{upsampler_rep_forward.1} parent=39 // pred_check_branch
        %633 = sbr.rel (%p631) target = $region44
      $region43: #{upsampler_rep_forward.1} parent=39 // pred_region
        %s634 = smul.u32 32, %s21
        %p635 = scmp.lt.s32.totalorder %s20, 1
        %s636 = scalar_select %p635, %s20, 1
        %p637 = scmp.lt.s32.totalorder %s634, 31
        %s638 = scalar_select %p637, %s634, 31
        %s639 = smul.addr %s636, 32
        %s640 = sadd.s32 %s638, %s639
        %s641 = smul.addr %s640, 8
        %s642 = scalar_lea.vmem %s3, %s641
      $region44: #{upsampler_rep_forward.1} parent=39 // pred_fallthru
        _
    $region40: #{upsampler_rep_forward.1} parent=5 // pred_fallthru
      _
  $region6: #{upsampler_rep_forward.1} parent=0 // loop_footer
    %s13 = sadd.s32 1, %s9
  $region7: #{upsampler_rep_forward.1} parent=0 // loop_footer_branch
    %8 = sbr.rel target = $region3
  $region8: #{upsampler_rep_forward.1} parent=0 // loop_exit
    _

</llo_original>
